<compile_context>
chip_gen: v5e
topology: v5e:2x2
jax: 0.10.0
libtpu: 0.0.40
codegen_flags: <defaults>
</compile_context>

<pallas_src>
import functools
import math

import jax
import jax.numpy as jnp
from jax.experimental import pallas as pl
from jax.experimental.pallas import tpu as pltpu


def _round_up(x, m):
    return ((x + m - 1) // m) * m


def _vae_kernel(x_ref, eps_ref,
                we1_ref, be1_ref, we2_ref, be2_ref,
                wh_ref, bh_ref,
                wd1_ref, bd1_ref, wd2_ref, bd2_ref, wd3_ref, bd3_ref,
                out_ref, *, fold):
    latent_dim = eps_ref.shape[1]
    x = x_ref[...]

    # ---- Encoder: Linear(input,64)+ReLU -> Linear(64,32)+ReLU ----
    h = jnp.dot(x, we1_ref[...], preferred_element_type=jnp.float32) + be1_ref[...]
    h = jnp.maximum(h, 0.0)
    h = jnp.dot(h, we2_ref[...], preferred_element_type=jnp.float32) + be2_ref[...]
    h = jnp.maximum(h, 0.0)

    # ---- Fused mu/logvar heads: one (32, 2*latent) matmul ----
    ml = jnp.dot(h, wh_ref[...], preferred_element_type=jnp.float32) + bh_ref[...]
    mu = ml[:, :latent_dim]
    logvar = ml[:, latent_dim:]

    # ---- Reparameterize: z = mu + eps * exp(0.5 * logvar) ----
    z = mu + eps_ref[...] * jnp.exp(0.5 * logvar)

    # ---- Decoder: Linear(latent,32)+ReLU -> Linear(32,64)+ReLU -> Linear(64,input) ----
    d = jnp.dot(z, wd1_ref[...], preferred_element_type=jnp.float32) + bd1_ref[...]
    d = jnp.maximum(d, 0.0)
    d = jnp.dot(d, wd2_ref[...], preferred_element_type=jnp.float32) + bd2_ref[...]
    d = jnp.maximum(d, 0.0)
    recon = jnp.dot(d, wd3_ref[...], preferred_element_type=jnp.float32) + bd3_ref[...]

    if fold > 1:
        # Lane-dense output: pack `fold` consecutive batch rows into one
        # 128-lane-aligned output row (row-major; matches the wrapper's reshape).
        packed = jnp.concatenate([recon, ml], axis=-1)   # (TB, out_width)
        tb, ow = packed.shape
        out_ref[...] = packed.reshape(tb // fold, fold * ow)
    else:
        # Unfolded fallback: two direct sub-stores (avoids a concat temp).
        input_dim = recon.shape[1]
        out_ref[:, :input_dim] = recon
        out_ref[:, input_dim:] = ml


def _run_vae(x, eps, weights, *, fold, batch_tile, vmem_budget_bytes):
    """Run the kernel; returns the packed (B_pad, out_width) slab [recon | mu | logvar]."""
    B, input_dim = x.shape
    latent_dim = eps.shape[1]
    out_width = input_dim + 2 * latent_dim
    align = 8 * fold   # batch tile alignment: f32 sublanes x row-fold

    def padded_bytes(rows, cols):
        # f32 VMEM footprint with (8, 128) sublane/lane padding.
        return _round_up(max(rows, 1), 8) * _round_up(max(cols, 1), 128) * 4

    def vmem_estimate(tb):
        est = 2 * padded_bytes(tb, input_dim)                    # x tile (double buffered)
        est += 2 * padded_bytes(tb, latent_dim)                  # eps tile
        est += 2 * padded_bytes(tb // fold, fold * out_width)    # packed output tile
        est += sum(2 * padded_bytes(*w.shape) for w in weights)  # resident params
        est += 8 * padded_bytes(tb, 128)                         # live intermediates
        return est + (2 << 20)

    # Batch tile: as large as the VMEM budget allows (per-step pipeline overhead
    # dominates at small tiles), aligned so the folded output rows stay sublane-aligned.
    TB = max(align, _round_up(min(batch_tile, _round_up(B, align)), align))
    while TB > align and vmem_estimate(TB) > vmem_budget_bytes:
        TB = max(align, _round_up(TB // 2, align))
    # Keep >= 2 grid steps when the batch allows it so the "parallel" batch axis
    # can shard across the two TensorCores on v7x (harmless on v5e/v6e).
    if B > 4 * align and pl.cdiv(B, TB) < 2:
        TB = max(align, _round_up(pl.cdiv(B, 2), align))

    grid_b = pl.cdiv(B, TB)
    B_pad = grid_b * TB
    if B_pad != B:
        # Padded rows flow safely through exp(0.5*logvar) and are sliced off later.
        x = jnp.pad(x, ((0, B_pad - B), (0, 0)))
        eps = jnp.pad(eps, ((0, B_pad - B), (0, 0)))

    batched = lambda i: (i, 0)    # x / eps / packed output tiles march over batch
    resident = lambda i: (0, 0)   # weights & biases stay VMEM-resident

    in_specs = [
        pl.BlockSpec((TB, input_dim), batched),
        pl.BlockSpec((TB, latent_dim), batched),
    ] + [pl.BlockSpec(w.shape, resident) for w in weights]

    out_rows, out_cols = B_pad // fold, fold * out_width

    out = pl.pallas_call(
        functools.partial(_vae_kernel, fold=fold),
        out_shape=jax.ShapeDtypeStruct((out_rows, out_cols), jnp.float32),
        grid=(grid_b,),
        in_specs=in_specs,
        out_specs=pl.BlockSpec((TB // fold, out_cols), batched),
        compiler_params=pltpu.CompilerParams(
            dimension_semantics=("parallel",),
            vmem_limit_bytes=int(min(64 << 20, max(32 << 20, 2 * vmem_estimate(TB))))),
    )(x, eps, *weights)

    # Row-major reshape back to one packed row per batch element (free, contiguous).
    return out.reshape(B_pad, out_width)


def vae_forward(x, eps, params, *, batch_tile=1024, vmem_budget_bytes=44 << 20):
    """x: (B, input_dim) f32, eps: (B, latent_dim) f32.

    Returns (recon_x, mu, logvar), matching the PyTorch VAE.forward.
    """
    B, input_dim = x.shape
    latent_dim = eps.shape[1]
    out_width = input_dim + 2 * latent_dim

    # Fuse the mu / logvar head parameters in the wrapper (tiny; layout plumbing).
    wh = jnp.concatenate([params["wmu"], params["wlv"]], axis=1)  # (32, 2L)
    bh = jnp.concatenate([params["bmu"], params["blv"]], axis=1)  # (1, 2L)
    weights = (
        params["we1"], params["be1"], params["we2"], params["be2"],
        wh, bh,
        params["wd1"], params["bd1"], params["wd2"], params["bd2"],
        params["wd3"], params["bd3"],
    )

    # Smallest row-fold making the packed output a multiple of 128 lanes.
    fold = 128 // math.gcd(out_width, 128)
    if fold > 16:   # degenerate widths: don't force a huge batch alignment
        fold = 1

    try:
        out = _run_vae(x, eps, weights, fold=fold, batch_tile=batch_tile,
                       vmem_budget_bytes=vmem_budget_bytes)
    except Exception:
        # Fallback if Mosaic rejects the sublane->lane fold reshape on this backend.
        if fold == 1:
            raise
        out = _run_vae(x, eps, weights, fold=1, batch_tile=batch_tile,
                       vmem_budget_bytes=vmem_budget_bytes)

    recon = out[:B, :input_dim]
    mu = out[:B, input_dim:input_dim + latent_dim]
    logvar = out[:B, input_dim + latent_dim:]
    return recon, mu, logvar


def init_params(key, input_dim, latent_dim):
    """Deterministic synthetic parameters. Weights stored (in, out), biases (1, out)."""
    dims = {
        "we1": (input_dim, 64), "we2": (64, 32),
        "wmu": (32, latent_dim), "wlv": (32, latent_dim),
        "wd1": (latent_dim, 32), "wd2": (32, 64), "wd3": (64, input_dim),
    }
    params = {}
    keys = jax.random.split(key, len(dims))
    for (name, shape), k in zip(sorted(dims.items()), keys):
        fan_in = shape[0]
        scale = 1.0 / jnp.sqrt(jnp.float32(fan_in))
        params[name] = jax.random.uniform(k, shape, jnp.float32, -1.0, 1.0) * scale
        params["b" + name[1:]] = jnp.full((1, shape[1]), 0.01, jnp.float32)
    return params


def vae_reference(x, eps, p):
    """Plain-JAX reference mirroring the PyTorch forward."""
    h = jnp.maximum(x @ p["we1"] + p["be1"], 0.0)
    h = jnp.maximum(h @ p["we2"] + p["be2"], 0.0)
    mu = h @ p["wmu"] + p["bmu"]
    logvar = h @ p["wlv"] + p["blv"]
    z = mu + eps * jnp.exp(0.5 * logvar)
    d = jnp.maximum(z @ p["wd1"] + p["bd1"], 0.0)
    d = jnp.maximum(d @ p["wd2"] + p["bd2"], 0.0)
    recon = d @ p["wd3"] + p["bd3"]
    return recon, mu, logvar


def _check(x, eps, params):
    recon, mu, logvar = vae_forward(x, eps, params)
    jax.block_until_ready((recon, mu, logvar))
    r_ref, mu_ref, lv_ref = vae_reference(x, eps, params)
    assert jnp.allclose(recon, r_ref, atol=1e-5, rtol=1e-5)
    assert jnp.allclose(mu, mu_ref, atol=1e-5, rtol=1e-5)
    assert jnp.allclose(logvar, lv_ref, atol=1e-5, rtol=1e-5)


if __name__ == "__main__":
    key = jax.random.PRNGKey(0)
    k_x, k_eps, k_p, k_x2, k_eps2, k_x3, k_eps3 = jax.random.split(key, 7)

    INPUT_DIM, LATENT_DIM = 16, 8
    params = init_params(k_p, INPUT_DIM, LATENT_DIM)

    # Small batch (single grid step, TB shrinks to the 8*fold alignment).
    B = 8
    x = jax.random.normal(k_x, (B, INPUT_DIM), jnp.float32)
    eps = jax.random.normal(k_eps, (B, LATENT_DIM), jnp.float32)
    _check(x, eps, params)

    # Medium batch exercising padding + the >=2-grid-step (megacore) path.
    B2 = 200
    x2 = jax.random.normal(k_x2, (B2, INPUT_DIM), jnp.float32)
    eps2 = jax.random.normal(k_eps2, (B2, LATENT_DIM), jnp.float32)
    _check(x2, eps2, params)

    # Larger batch exercising the full 1024-row tile with a 2-step grid.
    B3 = 2048
    x3 = jax.random.normal(k_x3, (B3, INPUT_DIM), jnp.float32)
    eps3 = jax.random.normal(k_eps3, (B3, LATENT_DIM), jnp.float32)
    _check(x3, eps3, params)

    print("KERNEL_OK")
</pallas_src>

<mosaic_0001>
module attributes {stable_mosaic.version = 11 : i64} {
  func.func @_vae_kernel(%arg0: i32, %arg1: memref<32x16xf32, #tpu.memory_space<vmem>>, %arg2: memref<32x8xf32, #tpu.memory_space<vmem>>, %arg3: memref<16x64xf32, #tpu.memory_space<vmem>>, %arg4: memref<1x64xf32, #tpu.memory_space<vmem>>, %arg5: memref<64x32xf32, #tpu.memory_space<vmem>>, %arg6: memref<1x32xf32, #tpu.memory_space<vmem>>, %arg7: memref<32x16xf32, #tpu.memory_space<vmem>>, %arg8: memref<1x16xf32, #tpu.memory_space<vmem>>, %arg9: memref<8x32xf32, #tpu.memory_space<vmem>>, %arg10: memref<1x32xf32, #tpu.memory_space<vmem>>, %arg11: memref<32x64xf32, #tpu.memory_space<vmem>>, %arg12: memref<1x64xf32, #tpu.memory_space<vmem>>, %arg13: memref<64x16xf32, #tpu.memory_space<vmem>>, %arg14: memref<1x16xf32, #tpu.memory_space<vmem>>, %arg15: memref<8x128xf32, #tpu.memory_space<vmem>>) attributes {dimension_semantics = [#tpu.dimension_semantics<parallel>], iteration_bounds = array<i64: 1>, scalar_prefetch = 0 : i64, scratch_operands = 0 : i64, tpu.core_type = #tpu.core_type<tc>, window_params = [{transform_indices = @transform_0, window_bounds = array<i64: 32, 16>}, {transform_indices = @transform_1, window_bounds = array<i64: 32, 8>}, {pipeline_mode = #tpu.pipeline_mode<synchronous>, transform_indices = @transform_2, window_bounds = array<i64: 16, 64>}, {pipeline_mode = #tpu.pipeline_mode<synchronous>, transform_indices = @transform_3, window_bounds = array<i64: 1, 64>}, {pipeline_mode = #tpu.pipeline_mode<synchronous>, transform_indices = @transform_4, window_bounds = array<i64: 64, 32>}, {pipeline_mode = #tpu.pipeline_mode<synchronous>, transform_indices = @transform_5, window_bounds = array<i64: 1, 32>}, {pipeline_mode = #tpu.pipeline_mode<synchronous>, transform_indices = @transform_6, window_bounds = array<i64: 32, 16>}, {pipeline_mode = #tpu.pipeline_mode<synchronous>, transform_indices = @transform_7, window_bounds = array<i64: 1, 16>}, {pipeline_mode = #tpu.pipeline_mode<synchronous>, transform_indices = @transform_8, window_bounds = array<i64: 8, 32>}, {pipeline_mode = #tpu.pipeline_mode<synchronous>, transform_indices = @transform_9, window_bounds = array<i64: 1, 32>}, {pipeline_mode = #tpu.pipeline_mode<synchronous>, transform_indices = @transform_10, window_bounds = array<i64: 32, 64>}, {pipeline_mode = #tpu.pipeline_mode<synchronous>, transform_indices = @transform_11, window_bounds = array<i64: 1, 64>}, {pipeline_mode = #tpu.pipeline_mode<synchronous>, transform_indices = @transform_12, window_bounds = array<i64: 64, 16>}, {pipeline_mode = #tpu.pipeline_mode<synchronous>, transform_indices = @transform_13, window_bounds = array<i64: 1, 16>}, {transform_indices = @transform_14, window_bounds = array<i64: 8, 128>}]} {
    %c0 = arith.constant 0 : index
    %c0_0 = arith.constant 0 : index
    %0 = vector.load %arg1[%c0, %c0_0] : memref<32x16xf32, #tpu.memory_space<vmem>>, vector<32x16xf32>
    %c0_1 = arith.constant 0 : index
    %c0_2 = arith.constant 0 : index
    %1 = vector.load %arg3[%c0_1, %c0_2] : memref<16x64xf32, #tpu.memory_space<vmem>>, vector<16x64xf32>
    %cst = arith.constant dense<0.000000e+00> : vector<32x64xf32>
    %2 = tpu.matmul %0, %1, %cst {dimension_numbers = #tpu.dot_dimension_numbers<[1], [0], [0], [1], [0, 0, 1, 1], [], []>} : vector<32x16xf32>, vector<16x64xf32>, vector<32x64xf32> -> vector<32x64xf32>
    %c0_3 = arith.constant 0 : index
    %c0_4 = arith.constant 0 : index
    %3 = vector.load %arg4[%c0_3, %c0_4] : memref<1x64xf32, #tpu.memory_space<vmem>>, vector<1x64xf32>
    %4 = vector.broadcast %3 : vector<1x64xf32> to vector<32x64xf32>
    %5 = arith.addf %2, %4 : vector<32x64xf32>
    %cst_5 = arith.constant 0.000000e+00 : f32
    %6 = vector.broadcast %cst_5 : f32 to vector<32x64xf32>
    %7 = arith.maximumf %5, %6 : vector<32x64xf32>
    %c0_6 = arith.constant 0 : index
    %c0_7 = arith.constant 0 : index
    %8 = vector.load %arg5[%c0_6, %c0_7] : memref<64x32xf32, #tpu.memory_space<vmem>>, vector<64x32xf32>
    %cst_8 = arith.constant dense<0.000000e+00> : vector<32x32xf32>
    %9 = tpu.matmul %7, %8, %cst_8 {dimension_numbers = #tpu.dot_dimension_numbers<[1], [0], [0], [1], [0, 0, 1, 1], [], []>} : vector<32x64xf32>, vector<64x32xf32>, vector<32x32xf32> -> vector<32x32xf32>
    %c0_9 = arith.constant 0 : index
    %c0_10 = arith.constant 0 : index
    %10 = vector.load %arg6[%c0_9, %c0_10] : memref<1x32xf32, #tpu.memory_space<vmem>>, vector<1x32xf32>
    %11 = vector.broadcast %10 : vector<1x32xf32> to vector<32x32xf32>
    %12 = arith.addf %9, %11 : vector<32x32xf32>
    %cst_11 = arith.constant 0.000000e+00 : f32
    %13 = vector.broadcast %cst_11 : f32 to vector<32x32xf32>
    %14 = arith.maximumf %12, %13 : vector<32x32xf32>
    %c0_12 = arith.constant 0 : index
    %c0_13 = arith.constant 0 : index
    %15 = vector.load %arg7[%c0_12, %c0_13] : memref<32x16xf32, #tpu.memory_space<vmem>>, vector<32x16xf32>
    %cst_14 = arith.constant dense<0.000000e+00> : vector<32x16xf32>
    %16 = tpu.matmul %14, %15, %cst_14 {dimension_numbers = #tpu.dot_dimension_numbers<[1], [0], [0], [1], [0, 0, 1, 1], [], []>} : vector<32x32xf32>, vector<32x16xf32>, vector<32x16xf32> -> vector<32x16xf32>
    %c0_15 = arith.constant 0 : index
    %c0_16 = arith.constant 0 : index
    %17 = vector.load %arg8[%c0_15, %c0_16] : memref<1x16xf32, #tpu.memory_space<vmem>>, vector<1x16xf32>
    %18 = vector.broadcast %17 : vector<1x16xf32> to vector<32x16xf32>
    %19 = arith.addf %16, %18 : vector<32x16xf32>
    %20 = vector.extract_strided_slice %19 {offsets = [0, 0], sizes = [32, 8], strides = [1, 1]} : vector<32x16xf32> to vector<32x8xf32>
    %21 = vector.extract_strided_slice %19 {offsets = [0, 8], sizes = [32, 8], strides = [1, 1]} : vector<32x16xf32> to vector<32x8xf32>
    %c0_17 = arith.constant 0 : index
    %c0_18 = arith.constant 0 : index
    %22 = vector.load %arg2[%c0_17, %c0_18] : memref<32x8xf32, #tpu.memory_space<vmem>>, vector<32x8xf32>
    %cst_19 = arith.constant 5.000000e-01 : f32
    %23 = vector.broadcast %cst_19 : f32 to vector<32x8xf32>
    %24 = arith.mulf %23, %21 : vector<32x8xf32>
    %25 = math.exp %24 : vector<32x8xf32>
    %26 = arith.mulf %22, %25 : vector<32x8xf32>
    %27 = arith.addf %20, %26 : vector<32x8xf32>
    %c0_20 = arith.constant 0 : index
    %c0_21 = arith.constant 0 : index
    %28 = vector.load %arg9[%c0_20, %c0_21] : memref<8x32xf32, #tpu.memory_space<vmem>>, vector<8x32xf32>
    %cst_22 = arith.constant dense<0.000000e+00> : vector<32x32xf32>
    %29 = tpu.matmul %27, %28, %cst_22 {dimension_numbers = #tpu.dot_dimension_numbers<[1], [0], [0], [1], [0, 0, 1, 1], [], []>} : vector<32x8xf32>, vector<8x32xf32>, vector<32x32xf32> -> vector<32x32xf32>
    %c0_23 = arith.constant 0 : index
    %c0_24 = arith.constant 0 : index
    %30 = vector.load %arg10[%c0_23, %c0_24] : memref<1x32xf32, #tpu.memory_space<vmem>>, vector<1x32xf32>
    %31 = vector.broadcast %30 : vector<1x32xf32> to vector<32x32xf32>
    %32 = arith.addf %29, %31 : vector<32x32xf32>
    %cst_25 = arith.constant 0.000000e+00 : f32
    %33 = vector.broadcast %cst_25 : f32 to vector<32x32xf32>
    %34 = arith.maximumf %32, %33 : vector<32x32xf32>
    %c0_26 = arith.constant 0 : index
    %c0_27 = arith.constant 0 : index
    %35 = vector.load %arg11[%c0_26, %c0_27] : memref<32x64xf32, #tpu.memory_space<vmem>>, vector<32x64xf32>
    %cst_28 = arith.constant dense<0.000000e+00> : vector<32x64xf32>
    %36 = tpu.matmul %34, %35, %cst_28 {dimension_numbers = #tpu.dot_dimension_numbers<[1], [0], [0], [1], [0, 0, 1, 1], [], []>} : vector<32x32xf32>, vector<32x64xf32>, vector<32x64xf32> -> vector<32x64xf32>
    %c0_29 = arith.constant 0 : index
    %c0_30 = arith.constant 0 : index
    %37 = vector.load %arg12[%c0_29, %c0_30] : memref<1x64xf32, #tpu.memory_space<vmem>>, vector<1x64xf32>
    %38 = vector.broadcast %37 : vector<1x64xf32> to vector<32x64xf32>
    %39 = arith.addf %36, %38 : vector<32x64xf32>
    %cst_31 = arith.constant 0.000000e+00 : f32
    %40 = vector.broadcast %cst_31 : f32 to vector<32x64xf32>
    %41 = arith.maximumf %39, %40 : vector<32x64xf32>
    %c0_32 = arith.constant 0 : index
    %c0_33 = arith.constant 0 : index
    %42 = vector.load %arg13[%c0_32, %c0_33] : memref<64x16xf32, #tpu.memory_space<vmem>>, vector<64x16xf32>
    %cst_34 = arith.constant dense<0.000000e+00> : vector<32x16xf32>
    %43 = tpu.matmul %41, %42, %cst_34 {dimension_numbers = #tpu.dot_dimension_numbers<[1], [0], [0], [1], [0, 0, 1, 1], [], []>} : vector<32x64xf32>, vector<64x16xf32>, vector<32x16xf32> -> vector<32x16xf32>
    %c0_35 = arith.constant 0 : index
    %c0_36 = arith.constant 0 : index
    %44 = vector.load %arg14[%c0_35, %c0_36] : memref<1x16xf32, #tpu.memory_space<vmem>>, vector<1x16xf32>
    %45 = vector.broadcast %44 : vector<1x16xf32> to vector<32x16xf32>
    %46 = arith.addf %43, %45 : vector<32x16xf32>
    %47 = tpu.concatenate %46, %19 in 1 : vector<32x16xf32>, vector<32x16xf32> -> vector<32x32xf32>
    %48 = vector.shape_cast %47 : vector<32x32xf32> to vector<8x128xf32>
    %c0_37 = arith.constant 0 : index
    %c0_38 = arith.constant 0 : index
    %49 = vector.load %arg15[%c0_37, %c0_38] : memref<8x128xf32, #tpu.memory_space<vmem>>, vector<8x128xf32>
    tpu.vector_store %arg15[%c0_37, %c0_38], %48 {strides = array<i32>} : memref<8x128xf32, #tpu.memory_space<vmem>>, vector<8x128xf32>,
    return
  }
  func.func @transform_0(%arg0: i32) -> (i32, i32) {
    %c0_i32 = arith.constant 0 : i32
    %c0_i32_0 = arith.constant 0 : i32
    return %arg0, %c0_i32 : i32, i32
  }
  func.func @transform_1(%arg0: i32) -> (i32, i32) {
    %c0_i32 = arith.constant 0 : i32
    %c0_i32_0 = arith.constant 0 : i32
    return %arg0, %c0_i32 : i32, i32
  }
  func.func @transform_2(%arg0: i32) -> (i32, i32) {
    %c0_i32 = arith.constant 0 : i32
    %c0_i32_0 = arith.constant 0 : i32
    %c0_i32_1 = arith.constant 0 : i32
    return %c0_i32, %c0_i32_0 : i32, i32
  }
  func.func @transform_3(%arg0: i32) -> (i32, i32) {
    %c0_i32 = arith.constant 0 : i32
    %c0_i32_0 = arith.constant 0 : i32
    %c0_i32_1 = arith.constant 0 : i32
    return %c0_i32, %c0_i32_0 : i32, i32
  }
  func.func @transform_4(%arg0: i32) -> (i32, i32) {
    %c0_i32 = arith.constant 0 : i32
    %c0_i32_0 = arith.constant 0 : i32
    %c0_i32_1 = arith.constant 0 : i32
    return %c0_i32, %c0_i32_0 : i32, i32
  }
  func.func @transform_5(%arg0: i32) -> (i32, i32) {
    %c0_i32 = arith.constant 0 : i32
    %c0_i32_0 = arith.constant 0 : i32
    %c0_i32_1 = arith.constant 0 : i32
    return %c0_i32, %c0_i32_0 : i32, i32
  }
  func.func @transform_6(%arg0: i32) -> (i32, i32) {
    %c0_i32 = arith.constant 0 : i32
    %c0_i32_0 = arith.constant 0 : i32
    %c0_i32_1 = arith.constant 0 : i32
    return %c0_i32, %c0_i32_0 : i32, i32
  }
  func.func @transform_7(%arg0: i32) -> (i32, i32) {
    %c0_i32 = arith.constant 0 : i32
    %c0_i32_0 = arith.constant 0 : i32
    %c0_i32_1 = arith.constant 0 : i32
    return %c0_i32, %c0_i32_0 : i32, i32
  }
  func.func @transform_8(%arg0: i32) -> (i32, i32) {
    %c0_i32 = arith.constant 0 : i32
    %c0_i32_0 = arith.constant 0 : i32
    %c0_i32_1 = arith.constant 0 : i32
    return %c0_i32, %c0_i32_0 : i32, i32
  }
  func.func @transform_9(%arg0: i32) -> (i32, i32) {
    %c0_i32 = arith.constant 0 : i32
    %c0_i32_0 = arith.constant 0 : i32
    %c0_i32_1 = arith.constant 0 : i32
    return %c0_i32, %c0_i32_0 : i32, i32
  }
  func.func @transform_10(%arg0: i32) -> (i32, i32) {
    %c0_i32 = arith.constant 0 : i32
    %c0_i32_0 = arith.constant 0 : i32
    %c0_i32_1 = arith.constant 0 : i32
    return %c0_i32, %c0_i32_0 : i32, i32
  }
  func.func @transform_11(%arg0: i32) -> (i32, i32) {
    %c0_i32 = arith.constant 0 : i32
    %c0_i32_0 = arith.constant 0 : i32
    %c0_i32_1 = arith.constant 0 : i32
    return %c0_i32, %c0_i32_0 : i32, i32
  }
  func.func @transform_12(%arg0: i32) -> (i32, i32) {
    %c0_i32 = arith.constant 0 : i32
    %c0_i32_0 = arith.constant 0 : i32
    %c0_i32_1 = arith.constant 0 : i32
    return %c0_i32, %c0_i32_0 : i32, i32
  }
  func.func @transform_13(%arg0: i32) -> (i32, i32) {
    %c0_i32 = arith.constant 0 : i32
    %c0_i32_0 = arith.constant 0 : i32
    %c0_i32_1 = arith.constant 0 : i32
    return %c0_i32, %c0_i32_0 : i32, i32
  }
  func.func @transform_14(%arg0: i32) -> (i32, i32) {
    %c0_i32 = arith.constant 0 : i32
    %c0_i32_0 = arith.constant 0 : i32
    return %arg0, %c0_i32 : i32, i32
  }
}

module attributes {stable_mosaic.version = 11 : i64} {
  func.func @_vae_kernel(%arg0: i32, %arg1: memref<8x16xf32, #tpu.memory_space<vmem>>, %arg2: memref<8x8xf32, #tpu.memory_space<vmem>>, %arg3: memref<16x64xf32, #tpu.memory_space<vmem>>, %arg4: memref<1x64xf32, #tpu.memory_space<vmem>>, %arg5: memref<64x32xf32, #tpu.memory_space<vmem>>, %arg6: memref<1x32xf32, #tpu.memory_space<vmem>>, %arg7: memref<32x16xf32, #tpu.memory_space<vmem>>, %arg8: memref<1x16xf32, #tpu.memory_space<vmem>>, %arg9: memref<8x32xf32, #tpu.memory_space<vmem>>, %arg10: memref<1x32xf32, #tpu.memory_space<vmem>>, %arg11: memref<32x64xf32, #tpu.memory_space<vmem>>, %arg12: memref<1x64xf32, #tpu.memory_space<vmem>>, %arg13: memref<64x16xf32, #tpu.memory_space<vmem>>, %arg14: memref<1x16xf32, #tpu.memory_space<vmem>>, %arg15: memref<8x32xf32, #tpu.memory_space<vmem>>) attributes {dimension_semantics = [#tpu.dimension_semantics<parallel>], iteration_bounds = array<i64: 1>, scalar_prefetch = 0 : i64, scratch_operands = 0 : i64, tpu.core_type = #tpu.core_type<tc>, window_params = [{transform_indices = @transform_0, window_bounds = array<i64: 8, 16>}, {transform_indices = @transform_1, window_bounds = array<i64: 8, 8>}, {pipeline_mode = #tpu.pipeline_mode<synchronous>, transform_indices = @transform_2, window_bounds = array<i64: 16, 64>}, {pipeline_mode = #tpu.pipeline_mode<synchronous>, transform_indices = @transform_3, window_bounds = array<i64: 1, 64>}, {pipeline_mode = #tpu.pipeline_mode<synchronous>, transform_indices = @transform_4, window_bounds = array<i64: 64, 32>}, {pipeline_mode = #tpu.pipeline_mode<synchronous>, transform_indices = @transform_5, window_bounds = array<i64: 1, 32>}, {pipeline_mode = #tpu.pipeline_mode<synchronous>, transform_indices = @transform_6, window_bounds = array<i64: 32, 16>}, {pipeline_mode = #tpu.pipeline_mode<synchronous>, transform_indices = @transform_7, window_bounds = array<i64: 1, 16>}, {pipeline_mode = #tpu.pipeline_mode<synchronous>, transform_indices = @transform_8, window_bounds = array<i64: 8, 32>}, {pipeline_mode = #tpu.pipeline_mode<synchronous>, transform_indices = @transform_9, window_bounds = array<i64: 1, 32>}, {pipeline_mode = #tpu.pipeline_mode<synchronous>, transform_indices = @transform_10, window_bounds = array<i64: 32, 64>}, {pipeline_mode = #tpu.pipeline_mode<synchronous>, transform_indices = @transform_11, window_bounds = array<i64: 1, 64>}, {pipeline_mode = #tpu.pipeline_mode<synchronous>, transform_indices = @transform_12, window_bounds = array<i64: 64, 16>}, {pipeline_mode = #tpu.pipeline_mode<synchronous>, transform_indices = @transform_13, window_bounds = array<i64: 1, 16>}, {transform_indices = @transform_14, window_bounds = array<i64: 8, 32>}]} {
    %c0 = arith.constant 0 : index
    %c0_0 = arith.constant 0 : index
    %0 = vector.load %arg1[%c0, %c0_0] : memref<8x16xf32, #tpu.memory_space<vmem>>, vector<8x16xf32>
    %c0_1 = arith.constant 0 : index
    %c0_2 = arith.constant 0 : index
    %1 = vector.load %arg3[%c0_1, %c0_2] : memref<16x64xf32, #tpu.memory_space<vmem>>, vector<16x64xf32>
    %cst = arith.constant dense<0.000000e+00> : vector<8x64xf32>
    %2 = tpu.matmul %0, %1, %cst {dimension_numbers = #tpu.dot_dimension_numbers<[1], [0], [0], [1], [0, 0, 1, 1], [], []>} : vector<8x16xf32>, vector<16x64xf32>, vector<8x64xf32> -> vector<8x64xf32>
    %c0_3 = arith.constant 0 : index
    %c0_4 = arith.constant 0 : index
    %3 = vector.load %arg4[%c0_3, %c0_4] : memref<1x64xf32, #tpu.memory_space<vmem>>, vector<1x64xf32>
    %4 = vector.broadcast %3 : vector<1x64xf32> to vector<8x64xf32>
    %5 = arith.addf %2, %4 : vector<8x64xf32>
    %cst_5 = arith.constant 0.000000e+00 : f32
    %6 = vector.broadcast %cst_5 : f32 to vector<8x64xf32>
    %7 = arith.maximumf %5, %6 : vector<8x64xf32>
    %c0_6 = arith.constant 0 : index
    %c0_7 = arith.constant 0 : index
    %8 = vector.load %arg5[%c0_6, %c0_7] : memref<64x32xf32, #tpu.memory_space<vmem>>, vector<64x32xf32>
    %cst_8 = arith.constant dense<0.000000e+00> : vector<8x32xf32>
    %9 = tpu.matmul %7, %8, %cst_8 {dimension_numbers = #tpu.dot_dimension_numbers<[1], [0], [0], [1], [0, 0, 1, 1], [], []>} : vector<8x64xf32>, vector<64x32xf32>, vector<8x32xf32> -> vector<8x32xf32>
    %c0_9 = arith.constant 0 : index
    %c0_10 = arith.constant 0 : index
    %10 = vector.load %arg6[%c0_9, %c0_10] : memref<1x32xf32, #tpu.memory_space<vmem>>, vector<1x32xf32>
    %11 = vector.broadcast %10 : vector<1x32xf32> to vector<8x32xf32>
    %12 = arith.addf %9, %11 : vector<8x32xf32>
    %cst_11 = arith.constant 0.000000e+00 : f32
    %13 = vector.broadcast %cst_11 : f32 to vector<8x32xf32>
    %14 = arith.maximumf %12, %13 : vector<8x32xf32>
    %c0_12 = arith.constant 0 : index
    %c0_13 = arith.constant 0 : index
    %15 = vector.load %arg7[%c0_12, %c0_13] : memref<32x16xf32, #tpu.memory_space<vmem>>, vector<32x16xf32>
    %cst_14 = arith.constant dense<0.000000e+00> : vector<8x16xf32>
    %16 = tpu.matmul %14, %15, %cst_14 {dimension_numbers = #tpu.dot_dimension_numbers<[1], [0], [0], [1], [0, 0, 1, 1], [], []>} : vector<8x32xf32>, vector<32x16xf32>, vector<8x16xf32> -> vector<8x16xf32>
    %c0_15 = arith.constant 0 : index
    %c0_16 = arith.constant 0 : index
    %17 = vector.load %arg8[%c0_15, %c0_16] : memref<1x16xf32, #tpu.memory_space<vmem>>, vector<1x16xf32>
    %18 = vector.broadcast %17 : vector<1x16xf32> to vector<8x16xf32>
    %19 = arith.addf %16, %18 : vector<8x16xf32>
    %20 = vector.extract_strided_slice %19 {offsets = [0, 0], sizes = [8, 8], strides = [1, 1]} : vector<8x16xf32> to vector<8x8xf32>
    %21 = vector.extract_strided_slice %19 {offsets = [0, 8], sizes = [8, 8], strides = [1, 1]} : vector<8x16xf32> to vector<8x8xf32>
    %c0_17 = arith.constant 0 : index
    %c0_18 = arith.constant 0 : index
    %22 = vector.load %arg2[%c0_17, %c0_18] : memref<8x8xf32, #tpu.memory_space<vmem>>, vector<8x8xf32>
    %cst_19 = arith.constant 5.000000e-01 : f32
    %23 = vector.broadcast %cst_19 : f32 to vector<8x8xf32>
    %24 = arith.mulf %23, %21 : vector<8x8xf32>
    %25 = math.exp %24 : vector<8x8xf32>
    %26 = arith.mulf %22, %25 : vector<8x8xf32>
    %27 = arith.addf %20, %26 : vector<8x8xf32>
    %c0_20 = arith.constant 0 : index
    %c0_21 = arith.constant 0 : index
    %28 = vector.load %arg9[%c0_20, %c0_21] : memref<8x32xf32, #tpu.memory_space<vmem>>, vector<8x32xf32>
    %cst_22 = arith.constant dense<0.000000e+00> : vector<8x32xf32>
    %29 = tpu.matmul %27, %28, %cst_22 {dimension_numbers = #tpu.dot_dimension_numbers<[1], [0], [0], [1], [0, 0, 1, 1], [], []>} : vector<8x8xf32>, vector<8x32xf32>, vector<8x32xf32> -> vector<8x32xf32>
    %c0_23 = arith.constant 0 : index
    %c0_24 = arith.constant 0 : index
    %30 = vector.load %arg10[%c0_23, %c0_24] : memref<1x32xf32, #tpu.memory_space<vmem>>, vector<1x32xf32>
    %31 = vector.broadcast %30 : vector<1x32xf32> to vector<8x32xf32>
    %32 = arith.addf %29, %31 : vector<8x32xf32>
    %cst_25 = arith.constant 0.000000e+00 : f32
    %33 = vector.broadcast %cst_25 : f32 to vector<8x32xf32>
    %34 = arith.maximumf %32, %33 : vector<8x32xf32>
    %c0_26 = arith.constant 0 : index
    %c0_27 = arith.constant 0 : index
    %35 = vector.load %arg11[%c0_26, %c0_27] : memref<32x64xf32, #tpu.memory_space<vmem>>, vector<32x64xf32>
    %cst_28 = arith.constant dense<0.000000e+00> : vector<8x64xf32>
    %36 = tpu.matmul %34, %35, %cst_28 {dimension_numbers = #tpu.dot_dimension_numbers<[1], [0], [0], [1], [0, 0, 1, 1], [], []>} : vector<8x32xf32>, vector<32x64xf32>, vector<8x64xf32> -> vector<8x64xf32>
    %c0_29 = arith.constant 0 : index
    %c0_30 = arith.constant 0 : index
    %37 = vector.load %arg12[%c0_29, %c0_30] : memref<1x64xf32, #tpu.memory_space<vmem>>, vector<1x64xf32>
    %38 = vector.broadcast %37 : vector<1x64xf32> to vector<8x64xf32>
    %39 = arith.addf %36, %38 : vector<8x64xf32>
    %cst_31 = arith.constant 0.000000e+00 : f32
    %40 = vector.broadcast %cst_31 : f32 to vector<8x64xf32>
    %41 = arith.maximumf %39, %40 : vector<8x64xf32>
    %c0_32 = arith.constant 0 : index
    %c0_33 = arith.constant 0 : index
    %42 = vector.load %arg13[%c0_32, %c0_33] : memref<64x16xf32, #tpu.memory_space<vmem>>, vector<64x16xf32>
    %cst_34 = arith.constant dense<0.000000e+00> : vector<8x16xf32>
    %43 = tpu.matmul %41, %42, %cst_34 {dimension_numbers = #tpu.dot_dimension_numbers<[1], [0], [0], [1], [0, 0, 1, 1], [], []>} : vector<8x64xf32>, vector<64x16xf32>, vector<8x16xf32> -> vector<8x16xf32>
    %c0_35 = arith.constant 0 : index
    %c0_36 = arith.constant 0 : index
    %44 = vector.load %arg14[%c0_35, %c0_36] : memref<1x16xf32, #tpu.memory_space<vmem>>, vector<1x16xf32>
    %45 = vector.broadcast %44 : vector<1x16xf32> to vector<8x16xf32>
    %46 = arith.addf %43, %45 : vector<8x16xf32>
    %c0_37 = arith.constant 0 : index
    %c0_38 = arith.constant 0 : index
    %47 = vector.load %arg15[%c0_37, %c0_38] : memref<8x32xf32, #tpu.memory_space<vmem>>, vector<8x16xf32>
    tpu.vector_store %arg15[%c0_37, %c0_38], %46 {strides = array<i32>} : memref<8x32xf32, #tpu.memory_space<vmem>>, vector<8x16xf32>,
    %c0_39 = arith.constant 0 : index
    %c16 = arith.constant 16 : index
    %48 = vector.load %arg15[%c0_39, %c16] : memref<8x32xf32, #tpu.memory_space<vmem>>, vector<8x16xf32>
    tpu.vector_store %arg15[%c0_39, %c16], %19 {strides = array<i32>} : memref<8x32xf32, #tpu.memory_space<vmem>>, vector<8x16xf32>,
    return
  }
  func.func @transform_0(%arg0: i32) -> (i32, i32) {
    %c0_i32 = arith.constant 0 : i32
    %c0_i32_0 = arith.constant 0 : i32
    return %arg0, %c0_i32 : i32, i32
  }
  func.func @transform_1(%arg0: i32) -> (i32, i32) {
    %c0_i32 = arith.constant 0 : i32
    %c0_i32_0 = arith.constant 0 : i32
    return %arg0, %c0_i32 : i32, i32
  }
  func.func @transform_2(%arg0: i32) -> (i32, i32) {
    %c0_i32 = arith.constant 0 : i32
    %c0_i32_0 = arith.constant 0 : i32
    %c0_i32_1 = arith.constant 0 : i32
    return %c0_i32, %c0_i32_0 : i32, i32
  }
  func.func @transform_3(%arg0: i32) -> (i32, i32) {
    %c0_i32 = arith.constant 0 : i32
    %c0_i32_0 = arith.constant 0 : i32
    %c0_i32_1 = arith.constant 0 : i32
    return %c0_i32, %c0_i32_0 : i32, i32
  }
  func.func @transform_4(%arg0: i32) -> (i32, i32) {
    %c0_i32 = arith.constant 0 : i32
    %c0_i32_0 = arith.constant 0 : i32
    %c0_i32_1 = arith.constant 0 : i32
    return %c0_i32, %c0_i32_0 : i32, i32
  }
  func.func @transform_5(%arg0: i32) -> (i32, i32) {
    %c0_i32 = arith.constant 0 : i32
    %c0_i32_0 = arith.constant 0 : i32
    %c0_i32_1 = arith.constant 0 : i32
    return %c0_i32, %c0_i32_0 : i32, i32
  }
  func.func @transform_6(%arg0: i32) -> (i32, i32) {
    %c0_i32 = arith.constant 0 : i32
    %c0_i32_0 = arith.constant 0 : i32
    %c0_i32_1 = arith.constant 0 : i32
    return %c0_i32, %c0_i32_0 : i32, i32
  }
  func.func @transform_7(%arg0: i32) -> (i32, i32) {
    %c0_i32 = arith.constant 0 : i32
    %c0_i32_0 = arith.constant 0 : i32
    %c0_i32_1 = arith.constant 0 : i32
    return %c0_i32, %c0_i32_0 : i32, i32
  }
  func.func @transform_8(%arg0: i32) -> (i32, i32) {
    %c0_i32 = arith.constant 0 : i32
    %c0_i32_0 = arith.constant 0 : i32
    %c0_i32_1 = arith.constant 0 : i32
    return %c0_i32, %c0_i32_0 : i32, i32
  }
  func.func @transform_9(%arg0: i32) -> (i32, i32) {
    %c0_i32 = arith.constant 0 : i32
    %c0_i32_0 = arith.constant 0 : i32
    %c0_i32_1 = arith.constant 0 : i32
    return %c0_i32, %c0_i32_0 : i32, i32
  }
  func.func @transform_10(%arg0: i32) -> (i32, i32) {
    %c0_i32 = arith.constant 0 : i32
    %c0_i32_0 = arith.constant 0 : i32
    %c0_i32_1 = arith.constant 0 : i32
    return %c0_i32, %c0_i32_0 : i32, i32
  }
  func.func @transform_11(%arg0: i32) -> (i32, i32) {
    %c0_i32 = arith.constant 0 : i32
    %c0_i32_0 = arith.constant 0 : i32
    %c0_i32_1 = arith.constant 0 : i32
    return %c0_i32, %c0_i32_0 : i32, i32
  }
  func.func @transform_12(%arg0: i32) -> (i32, i32) {
    %c0_i32 = arith.constant 0 : i32
    %c0_i32_0 = arith.constant 0 : i32
    %c0_i32_1 = arith.constant 0 : i32
    return %c0_i32, %c0_i32_0 : i32, i32
  }
  func.func @transform_13(%arg0: i32) -> (i32, i32) {
    %c0_i32 = arith.constant 0 : i32
    %c0_i32_0 = arith.constant 0 : i32
    %c0_i32_1 = arith.constant 0 : i32
    return %c0_i32, %c0_i32_0 : i32, i32
  }
  func.func @transform_14(%arg0: i32) -> (i32, i32) {
    %c0_i32 = arith.constant 0 : i32
    %c0_i32_0 = arith.constant 0 : i32
    return %arg0, %c0_i32 : i32, i32
  }
}

</mosaic_0001>

<llo_original>
// kernel: tpu_custom_call.1
$region0: #{tpu_custom_call.1}
  #allocation0 [shape = 'u32[]', space=smem, size = 0x4, offset = 0x4, fixed_abs, tag = 'smem constant byte address 0x4 - core index']
  #allocation1 [shape = 'u32[72,128]{1,0:T(1,128)}', space=vmem, size = 0x9000, scoped, tag = 'internal scratch']
  %s0 = inlined_call_operand.vmem [shape: f32[8,16], index: 0, kind: input, shape index: {}]
  %s1 = inlined_call_operand.vmem [shape: f32[8,8], index: 1, kind: input, shape index: {}]
  %s2 = inlined_call_operand.vmem [shape: f32[16,64], index: 2, kind: input, shape index: {}]
  %s3 = inlined_call_operand.vmem [shape: f32[1,64], index: 3, kind: input, shape index: {}]
  %s4 = inlined_call_operand.vmem [shape: f32[64,32], index: 4, kind: input, shape index: {}]
  %s5 = inlined_call_operand.vmem [shape: f32[1,32], index: 5, kind: input, shape index: {}]
  %s6 = inlined_call_operand.vmem [shape: f32[32,16], index: 6, kind: input, shape index: {}]
  %s7 = inlined_call_operand.vmem [shape: f32[1,16], index: 7, kind: input, shape index: {}]
  %s8 = inlined_call_operand.vmem [shape: f32[8,32], index: 8, kind: input, shape index: {}]
  %s9 = inlined_call_operand.vmem [shape: f32[1,32], index: 9, kind: input, shape index: {}]
  %s10 = inlined_call_operand.vmem [shape: f32[32,64], index: 10, kind: input, shape index: {}]
  %s11 = inlined_call_operand.vmem [shape: f32[1,64], index: 11, kind: input, shape index: {}]
  %s12 = inlined_call_operand.vmem [shape: f32[64,16], index: 12, kind: input, shape index: {}]
  %s13 = inlined_call_operand.vmem [shape: f32[1,16], index: 13, kind: input, shape index: {}]
  %s14 = inlined_call_operand.hbm [shape: f32[8,32], index: 14, kind: output, shape index: {}]
  %s15 = sld [smem:[#allocation0]]
  $region66: #{tpu_custom_call.1} parent=0
    _
  %s17 = ssub.s32 1, %s15
  %s18 = scalar_select 0, %s17, %s15
  $region1: #{tpu_custom_call.1} parent=0
    #allocation2 [shape = 'u8[4096]{0}', space=vmem, size = 0x1000, scoped, tag = 'output window, operand 0, single buffered']
    #allocation3 [shape = 's32[1]{0}', space=sflag, size = 0x4, scoped, tag = 'scoped memory for tpu_custom_call.1']
    %19 = vsyncpa [#allocation3], 0
    // Predicated region
    $region2: #{tpu_custom_call.1} parent=1 // pred_check
      _
    $region3: #{tpu_custom_call.1} parent=1 // pred_check_branch
      %21 = sbr.rel (0) target = $region5
    $region4: #{tpu_custom_call.1} parent=1 // pred_region
      _
    $region5: #{tpu_custom_call.1} parent=1 // pred_fallthru
      _
    // Predicated region
    $region6: #{tpu_custom_call.1} parent=1 // pred_check
      _
    $region7: #{tpu_custom_call.1} parent=1 // pred_check_branch
      %23 = sbr.rel (0) target = $region9
    $region8: #{tpu_custom_call.1} parent=1 // pred_region
      _
    $region9: #{tpu_custom_call.1} parent=1 // pred_fallthru
      _
    // Predicated region
    $region10: #{tpu_custom_call.1} parent=1 // pred_check
      _
    $region11: #{tpu_custom_call.1} parent=1 // pred_check_branch
      %25 = sbr.rel (0) target = $region13
    $region12: #{tpu_custom_call.1} parent=1 // pred_region
      _
    $region13: #{tpu_custom_call.1} parent=1 // pred_fallthru
      _
    // Predicated region
    $region14: #{tpu_custom_call.1} parent=1 // pred_check
      _
    $region15: #{tpu_custom_call.1} parent=1 // pred_check_branch
      %27 = sbr.rel (0) target = $region17
    $region16: #{tpu_custom_call.1} parent=1 // pred_region
      _
    $region17: #{tpu_custom_call.1} parent=1 // pred_fallthru
      _
    // Predicated region
    $region18: #{tpu_custom_call.1} parent=1 // pred_check
      _
    $region19: #{tpu_custom_call.1} parent=1 // pred_check_branch
      %29 = sbr.rel (0) target = $region21
    $region20: #{tpu_custom_call.1} parent=1 // pred_region
      _
    $region21: #{tpu_custom_call.1} parent=1 // pred_fallthru
      _
    // Predicated region
    $region22: #{tpu_custom_call.1} parent=1 // pred_check
      _
    $region23: #{tpu_custom_call.1} parent=1 // pred_check_branch
      %31 = sbr.rel (0) target = $region25
    $region24: #{tpu_custom_call.1} parent=1 // pred_region
      _
    $region25: #{tpu_custom_call.1} parent=1 // pred_fallthru
      _
    // Predicated region
    $region26: #{tpu_custom_call.1} parent=1 // pred_check
      _
    $region27: #{tpu_custom_call.1} parent=1 // pred_check_branch
      %33 = sbr.rel (0) target = $region29
    $region28: #{tpu_custom_call.1} parent=1 // pred_region
      _
    $region29: #{tpu_custom_call.1} parent=1 // pred_fallthru
      _
    // Predicated region
    $region30: #{tpu_custom_call.1} parent=1 // pred_check
      _
    $region31: #{tpu_custom_call.1} parent=1 // pred_check_branch
      %35 = sbr.rel (0) target = $region33
    $region32: #{tpu_custom_call.1} parent=1 // pred_region
      _
    $region33: #{tpu_custom_call.1} parent=1 // pred_fallthru
      _
    // Predicated region
    $region34: #{tpu_custom_call.1} parent=1 // pred_check
      _
    $region35: #{tpu_custom_call.1} parent=1 // pred_check_branch
      %37 = sbr.rel (0) target = $region37
    $region36: #{tpu_custom_call.1} parent=1 // pred_region
      _
    $region37: #{tpu_custom_call.1} parent=1 // pred_fallthru
      _
    // Predicated region
    $region38: #{tpu_custom_call.1} parent=1 // pred_check
      _
    $region39: #{tpu_custom_call.1} parent=1 // pred_check_branch
      %39 = sbr.rel (0) target = $region41
    $region40: #{tpu_custom_call.1} parent=1 // pred_region
      _
    $region41: #{tpu_custom_call.1} parent=1 // pred_fallthru
      _
    // Predicated region
    $region42: #{tpu_custom_call.1} parent=1 // pred_check
      _
    $region43: #{tpu_custom_call.1} parent=1 // pred_check_branch
      %41 = sbr.rel (0) target = $region45
    $region44: #{tpu_custom_call.1} parent=1 // pred_region
      _
    $region45: #{tpu_custom_call.1} parent=1 // pred_fallthru
      _
    // Predicated region
    $region46: #{tpu_custom_call.1} parent=1 // pred_check
      _
    $region47: #{tpu_custom_call.1} parent=1 // pred_check_branch
      %43 = sbr.rel (0) target = $region49
    $region48: #{tpu_custom_call.1} parent=1 // pred_region
      _
    $region49: #{tpu_custom_call.1} parent=1 // pred_fallthru
      _
    // Predicated region
    $region50: #{tpu_custom_call.1} parent=1 // pred_check
      _
    $region51: #{tpu_custom_call.1} parent=1 // pred_check_branch
      %45 = sbr.rel (0) target = $region53
    $region52: #{tpu_custom_call.1} parent=1 // pred_region
      _
    $region53: #{tpu_custom_call.1} parent=1 // pred_fallthru
      _
    // Predicated region
    $region54: #{tpu_custom_call.1} parent=1 // pred_check
      _
    $region55: #{tpu_custom_call.1} parent=1 // pred_check_branch
      %47 = sbr.rel (0) target = $region57
    $region56: #{tpu_custom_call.1} parent=1 // pred_region
      _
    $region57: #{tpu_custom_call.1} parent=1 // pred_fallthru
      _
    %v48 = vld [vmem:[%s0] sm:$0xff]
    %v49 = vld [vmem:[%s2] sm:$0xff]
    %v50 = vld [vmem:[%s2 + $0x8] sm:$0xff]
    %v51 = vld [vmem:[%s3] sm:$0x1]
    %v53 = vperm.slane %v51, 0
    %vm55 = vcmask 130048
    %v57 = vsel %vm55, %v48, 0
    %59 = vmatpush.msra.mxu0 0.0
    %60 = vmatpush.msra.mxu0 0.0
    %61 = vmatpush.msra.mxu0 0.0
    %62 = vmatpush.msra.mxu0 0.0
    %63 = vmatpush.msra.mxu0 0.0
    %64 = vmatpush.msra.mxu0 0.0
    %65 = vmatpush.msra.mxu0 0.0
    %66 = vmatpush.msra.mxu0 0.0
    %67 = vmatpush.msra.mxu0 0.0
    %68 = vmatpush.msra.mxu0 0.0
    %69 = vmatpush.msra.mxu0 0.0
    %70 = vmatpush.msra.mxu0 0.0
    %71 = vmatpush.msra.mxu0 0.0
    %72 = vmatpush.msra.mxu0 0.0
    %73 = vmatpush.msra.mxu0 %v50
    %74 = vmatpush.msra.mxu0 %v49
    %75 = vmatmul.f32.gmra.mxu0 %v57
    %v76 = vpop.f32.mrf.mxu0
    %v77 = vadd.f32 %v53, %v76
    %78 = vdwg.mxu0
    %v79 = vmax.f32 %v77, 0.0
    %v80 = vld [vmem:[%s4] sm:$0xff]
    %v81 = vld [vmem:[%s4 + $0x8] sm:$0xff]
    %v82 = vld [vmem:[%s4 + $0x10] sm:$0xff]
    %v83 = vld [vmem:[%s4 + $0x18] sm:$0xff]
    %v84 = vld [vmem:[%s4 + $0x20] sm:$0xff]
    %v85 = vld [vmem:[%s4 + $0x28] sm:$0xff]
    %v86 = vld [vmem:[%s4 + $0x30] sm:$0xff]
    %v87 = vld [vmem:[%s4 + $0x38] sm:$0xff]
    %v88 = vld [vmem:[%s5] sm:$0x1]
    %v90 = vperm.slane %v88, 0
    %vm92 = vcmask 523264
    %v94 = vsel %vm92, %v79, 0
    %96 = vmatpush.msra.mxu0 0.0
    %97 = vmatpush.msra.mxu0 0.0
    %98 = vmatpush.msra.mxu0 0.0
    %99 = vmatpush.msra.mxu0 0.0
    %100 = vmatpush.msra.mxu0 0.0
    %101 = vmatpush.msra.mxu0 0.0
    %102 = vmatpush.msra.mxu0 0.0
    %103 = vmatpush.msra.mxu0 0.0
    %104 = vmatpush.msra.mxu0 %v87
    %105 = vmatpush.msra.mxu0 %v86
    %106 = vmatpush.msra.mxu0 %v85
    %107 = vmatpush.msra.mxu0 %v84
    %108 = vmatpush.msra.mxu0 %v83
    %109 = vmatpush.msra.mxu0 %v82
    %110 = vmatpush.msra.mxu0 %v81
    %111 = vmatpush.msra.mxu0 %v80
    %112 = vmatmul.f32.gmra.mxu0 %v94
    %v113 = vpop.f32.mrf.mxu0
    %v114 = vadd.f32 %v90, %v113
    %115 = vdwg.mxu0
    %v116 = vmax.f32 %v114, 0.0
    %v117 = vld [vmem:[%s6] sm:$0xff]
    %v118 = vld [vmem:[%s6 + $0x8] sm:$0xff]
    %v119 = vld [vmem:[%s6 + $0x10] sm:$0xff]
    %v120 = vld [vmem:[%s6 + $0x18] sm:$0xff]
    %v121 = vld [vmem:[%s7] sm:$0x1]
    %v123 = vperm.slane %v121, 0
    %vm125 = vcmask 261120
    %v127 = vsel %vm125, %v116, 0
    %129 = vmatpush.msra.mxu0 0.0
    %130 = vmatpush.msra.mxu0 0.0
    %131 = vmatpush.msra.mxu0 0.0
    %132 = vmatpush.msra.mxu0 0.0
    %133 = vmatpush.msra.mxu0 0.0
    %134 = vmatpush.msra.mxu0 0.0
    %135 = vmatpush.msra.mxu0 0.0
    %136 = vmatpush.msra.mxu0 0.0
    %137 = vmatpush.msra.mxu0 0.0
    %138 = vmatpush.msra.mxu0 0.0
    %139 = vmatpush.msra.mxu0 0.0
    %140 = vmatpush.msra.mxu0 0.0
    %141 = vmatpush.msra.mxu0 %v120
    %142 = vmatpush.msra.mxu0 %v119
    %143 = vmatpush.msra.mxu0 %v118
    %144 = vmatpush.msra.mxu0 %v117
    %145 = vmatmul.f32.gmra.mxu0 %v127
    %v146 = vpop.f32.mrf.mxu0
    %v147 = vadd.f32 %v123, %v146
    %148 = vdwg.mxu0
    %v149 = vld [vmem:[%s1] sm:$0xff]
    %v150 = vmul.f32 %v147, 0.5
    %v151 = vmul.f32 %v150, 1.442695
    %v152 = vpow.pop %v151
    %154 = vrot.lane.b32.xlu0 %v152, 120
    %v155 = vpop.permute.xlu0 %154
    %v157 = vmul.f32 %v149, %v155
    %v158 = vadd.f32 %v147, %v157
    %v159 = vld [vmem:[%s8] sm:$0xff]
    %v160 = vld [vmem:[%s9] sm:$0x1]
    %v162 = vperm.slane %v160, 0
    %vm164 = vcmask 64512
    %v166 = vsel %vm164, %v158, 0
    %168 = vmatpush.msra.mxu0 0.0
    %169 = vmatpush.msra.mxu0 0.0
    %170 = vmatpush.msra.mxu0 0.0
    %171 = vmatpush.msra.mxu0 0.0
    %172 = vmatpush.msra.mxu0 0.0
    %173 = vmatpush.msra.mxu0 0.0
    %174 = vmatpush.msra.mxu0 0.0
    %175 = vmatpush.msra.mxu0 0.0
    %176 = vmatpush.msra.mxu0 0.0
    %177 = vmatpush.msra.mxu0 0.0
    %178 = vmatpush.msra.mxu0 0.0
    %179 = vmatpush.msra.mxu0 0.0
    %180 = vmatpush.msra.mxu0 0.0
    %181 = vmatpush.msra.mxu0 0.0
    %182 = vmatpush.msra.mxu0 0.0
    %183 = vmatpush.msra.mxu0 %v159
    %184 = vmatmul.f32.gmra.mxu0 %v166
    %v185 = vpop.f32.mrf.mxu0
    %v186 = vadd.f32 %v162, %v185
    %187 = vdwg.mxu0
    %v188 = vmax.f32 %v186, 0.0
    %v189 = vld [vmem:[%s10] sm:$0xff]
    %v190 = vld [vmem:[%s10 + $0x8] sm:$0xff]
    %v191 = vld [vmem:[%s10 + $0x10] sm:$0xff]
    %v192 = vld [vmem:[%s10 + $0x18] sm:$0xff]
    %v193 = vld [vmem:[%s11] sm:$0x1]
    %v195 = vperm.slane %v193, 0
    %v198 = vsel %vm125, %v188, 0
    %200 = vmatpush.msra.mxu0 0.0
    %201 = vmatpush.msra.mxu0 0.0
    %202 = vmatpush.msra.mxu0 0.0
    %203 = vmatpush.msra.mxu0 0.0
    %204 = vmatpush.msra.mxu0 0.0
    %205 = vmatpush.msra.mxu0 0.0
    %206 = vmatpush.msra.mxu0 0.0
    %207 = vmatpush.msra.mxu0 0.0
    %208 = vmatpush.msra.mxu0 0.0
    %209 = vmatpush.msra.mxu0 0.0
    %210 = vmatpush.msra.mxu0 0.0
    %211 = vmatpush.msra.mxu0 0.0
    %212 = vmatpush.msra.mxu0 %v192
    %213 = vmatpush.msra.mxu0 %v191
    %214 = vmatpush.msra.mxu0 %v190
    %215 = vmatpush.msra.mxu0 %v189
    %216 = vmatmul.f32.gmra.mxu0 %v198
    %v217 = vpop.f32.mrf.mxu0
    %v218 = vadd.f32 %v195, %v217
    %219 = vdwg.mxu0
    %v220 = vmax.f32 %v218, 0.0
    %v221 = vld [vmem:[%s12] sm:$0xff]
    %v222 = vld [vmem:[%s12 + $0x8] sm:$0xff]
    %v223 = vld [vmem:[%s12 + $0x10] sm:$0xff]
    %v224 = vld [vmem:[%s12 + $0x18] sm:$0xff]
    %v225 = vld [vmem:[%s12 + $0x20] sm:$0xff]
    %v226 = vld [vmem:[%s12 + $0x28] sm:$0xff]
    %v227 = vld [vmem:[%s12 + $0x30] sm:$0xff]
    %v228 = vld [vmem:[%s12 + $0x38] sm:$0xff]
    %v229 = vld [vmem:[%s13] sm:$0x1]
    %v231 = vperm.slane %v229, 0
    %v234 = vsel %vm92, %v220, 0
    %236 = vmatpush.msra.mxu0 0.0
    %237 = vmatpush.msra.mxu0 0.0
    %238 = vmatpush.msra.mxu0 0.0
    %239 = vmatpush.msra.mxu0 0.0
    %240 = vmatpush.msra.mxu0 0.0
    %241 = vmatpush.msra.mxu0 0.0
    %242 = vmatpush.msra.mxu0 0.0
    %243 = vmatpush.msra.mxu0 0.0
    %244 = vmatpush.msra.mxu0 %v228
    %245 = vmatpush.msra.mxu0 %v227
    %246 = vmatpush.msra.mxu0 %v226
    %247 = vmatpush.msra.mxu0 %v225
    %248 = vmatpush.msra.mxu0 %v224
    %249 = vmatpush.msra.mxu0 %v223
    %250 = vmatpush.msra.mxu0 %v222
    %251 = vmatpush.msra.mxu0 %v221
    %252 = vmatmul.f32.gmra.mxu0 %v234
    %v253 = vpop.f32.mrf.mxu0
    %v254 = vadd.f32 %v231, %v253
    %255 = vdwg.mxu0
    %256 = vst.msk [vmem:[#allocation2] sm:$0xff] %vm55, %v254
    %258 = vrot.lane.b32.xlu0 %v147, 16
    %v259 = vpop.permute.xlu0 %258
    %vm261 = vcmask 261248
    %262 = vst.msk [vmem:[#allocation2] sm:$0xff] %vm261, %v259
    // Predicated region
    $region58: #{tpu_custom_call.1} parent=1 // pred_check
      _
    $region59: #{tpu_custom_call.1} parent=1 // pred_check_branch
      %264 = sbr.rel (0) target = $region61
    $region60: #{tpu_custom_call.1} parent=1 // pred_region
      %266 = vsyncadd [#allocation3], 0
      %s268 = sshll.u32 [#allocation2], 4
      %s269 = int_to_ptr.vmem [resolvable:$true] %s268
      %s270 = sshll.u32 %s14, 4
      %s271 = int_to_ptr.hbm [resolvable:$true] %s270
      %273 = dma.vmem_to_hbm [thread:$0]  %s269, 128, %s271, [#allocation3]
    $region61: #{tpu_custom_call.1} parent=1 // pred_fallthru
      _
    // Predicated region
    $region62: #{tpu_custom_call.1} parent=1 // pred_check
      _
    $region63: #{tpu_custom_call.1} parent=1 // pred_check_branch
      %275 = sbr.rel (0) target = $region65
    $region64: #{tpu_custom_call.1} parent=1 // pred_region
      %277 = dma.done [#allocation3], 128
    $region65: #{tpu_custom_call.1} parent=1 // pred_fallthru
      _
    %278 = vsyncpa [#allocation3], 1

</llo_original>
